<compile_context>
chip_gen: v7x
topology: tpu7x:2x2x1
jax: 0.10.0
libtpu: 0.0.40
codegen_flags: <defaults>
</compile_context>

<pallas_src>
import functools

import jax
import jax.numpy as jnp
from jax import lax
from jax.experimental import pallas as pl
from jax.experimental.pallas import tpu as pltpu

EPS = 1e-5          # torch.nn.LayerNorm default eps
_TM_PREF = 512      # row tile for mem-bound LN/MLP kernels
_TQ_PREF = 256      # query tile for the attention kernel


def _round_up(x, m):
    return ((x + m - 1) // m) * m


def _pick_vmem_limit():
    """Generation-aware scoped-VMEM limit (leave headroom for compiler scratch)."""
    cap = 128 * 1024 * 1024
    try:
        info = pltpu.get_tpu_info()
        cap = int(getattr(info, "vmem_capacity_bytes", cap) or cap)
    except Exception:
        pass
    return int(min(cap - 16 * 1024 * 1024, 100 * 1024 * 1024))


_VMEM_LIMIT = _pick_vmem_limit()


def _cp(*sem):
    return pltpu.CompilerParams(dimension_semantics=sem,
                                vmem_limit_bytes=_VMEM_LIMIT)


def _layernorm_f32(x, g, b):
    mu = jnp.mean(x, axis=-1, keepdims=True)
    var = jnp.mean((x - mu) ** 2, axis=-1, keepdims=True)
    return (x - mu) * lax.rsqrt(var + EPS) * g + b


def _gelu_exact(x):
    # torch.nn.GELU() default = exact (erf) form
    return 0.5 * x * (1.0 + lax.erf(x * 0.7071067811865476))


# --------------------------- kernel 1: LayerNorm + Linear ---------------------------
def ln_linear_kernel(x_ref, g_ref, b_ref, w_ref, wb_ref, o_ref):
    x = x_ref[...].astype(jnp.float32)                   # bf16 in HBM, LN stats in f32
    y = _layernorm_f32(x, g_ref[...], b_ref[...])
    acc = jnp.dot(y.astype(jnp.bfloat16), w_ref[...],    # bf16 x bf16 -> f32 acc (MXU)
                  preferred_element_type=jnp.float32)
    o_ref[...] = (acc + wb_ref[...]).astype(o_ref.dtype)


def ln_linear(x, g, b, w, wb):
    M, D = x.shape
    Dout = w.shape[1]
    tm = min(_TM_PREF, _round_up(M, 16))
    return pl.pallas_call(
        ln_linear_kernel,
        out_shape=jax.ShapeDtypeStruct((M, Dout), jnp.bfloat16),
        grid=(pl.cdiv(M, tm),),                          # ragged last block is fine
        in_specs=[
            pl.BlockSpec((tm, D), lambda i: (i, 0)),
            pl.BlockSpec((1, D), lambda i: (0, 0)),
            pl.BlockSpec((1, D), lambda i: (0, 0)),
            pl.BlockSpec((D, Dout), lambda i: (0, 0)),
            pl.BlockSpec((1, Dout), lambda i: (0, 0)),
        ],
        out_specs=pl.BlockSpec((tm, Dout), lambda i: (i, 0)),
        compiler_params=_cp("parallel"),
    )(x, g, b, w, wb)


# --------------------- kernel 2: flash-style multi-view attention --------------------
def flash_attention_kernel(q_ref, k_ref, v_ref, o_ref, m_sc, l_sc, acc_sc,
                           *, heads, dim_head):
    # q_ref: (1, tq, inner)   k_ref/v_ref: (1, K, inner)   o_ref: (1, tq, inner)
    view = pl.program_id(2)

    @pl.when(view == 0)
    def _():
        m_sc[...] = jnp.full_like(m_sc, -jnp.inf)
        l_sc[...] = jnp.zeros_like(l_sc)
        acc_sc[...] = jnp.zeros_like(acc_sc)

    q = q_ref[0]                                    # (tq, inner) bf16, scale pre-folded
    k = k_ref[0]                                    # (K,  inner) bf16
    v = v_ref[0]                                    # (K,  inner) bf16

    for h in range(heads):                          # static small loop
        c0, c1 = h * dim_head, (h + 1) * dim_head
        # TODO(synk): produce k_p pre-transposed (dh-major) so this contraction needs no
        # in-kernel RHS transpose, and add masked K tiling for very long key sequences.
        s = lax.dot_general(q[:, c0:c1], k[:, c0:c1],
                            (((1,), (1,)), ((), ())),
                            preferred_element_type=jnp.float32)     # (tq, K) f32
        m_prev = m_sc[:, h:h + 1]
        m_new = jnp.maximum(m_prev, jnp.max(s, axis=-1, keepdims=True))
        alpha = jnp.exp(m_prev - m_new)
        p = jnp.exp(s - m_new)
        l_sc[:, h:h + 1] = alpha * l_sc[:, h:h + 1] + jnp.sum(p, axis=-1, keepdims=True)
        m_sc[:, h:h + 1] = m_new
        acc_sc[:, c0:c1] = alpha * acc_sc[:, c0:c1] + jnp.dot(
            p.astype(jnp.bfloat16), v[:, c0:c1], preferred_element_type=jnp.float32)

    @pl.when(view == pl.num_programs(2) - 1)
    def _():
        outs = []
        for h in range(heads):
            inv_l = pl.reciprocal(l_sc[:, h:h + 1], approx=True)    # EUP slot
            outs.append((acc_sc[:, h * dim_head:(h + 1) * dim_head] * inv_l)
                        .astype(o_ref.dtype))
        o_ref[0] = jnp.concatenate(outs, axis=-1)   # one lane-dense store per Q tile


def cross_attention_core(q_p, k_p, v_p, *, b, n, q_len, k_len, heads, dim_head):
    inner = heads * dim_head
    # contiguous reshapes only (no HBM transposes for head split/merge)
    q3 = q_p.reshape(b * n, q_len, inner)
    k3 = k_p.reshape(b * n, k_len, inner)
    v3 = v_p.reshape(b * n, k_len, inner)

    tq = min(_TQ_PREF, _round_up(q_len, 16))
    n_qt = pl.cdiv(q_len, tq)

    kernel = functools.partial(flash_attention_kernel, heads=heads, dim_head=dim_head)
    return pl.pallas_call(
        kernel,
        out_shape=jax.ShapeDtypeStruct((b, q_len, inner), jnp.bfloat16),
        grid=(b, n_qt, n),                          # reduction (views) axis last
        in_specs=[
            pl.BlockSpec((1, tq, inner), lambda bi, qi, vi: (bi * n + vi, qi, 0)),
            pl.BlockSpec((1, k_len, inner), lambda bi, qi, vi: (bi * n + vi, 0, 0)),
            pl.BlockSpec((1, k_len, inner), lambda bi, qi, vi: (bi * n + vi, 0, 0)),
        ],
        out_specs=pl.BlockSpec((1, tq, inner), lambda bi, qi, vi: (bi, qi, 0)),
        scratch_shapes=[
            pltpu.VMEM((tq, heads), jnp.float32),   # running max per head
            pltpu.VMEM((tq, heads), jnp.float32),   # running sum per head
            pltpu.VMEM((tq, inner), jnp.float32),   # output accumulator (all heads)
        ],
        compiler_params=_cp("parallel", "parallel", "arbitrary"),
    )(q3, k3, v3)


# ------------------- kernel 3: proj + skip + prenorm + MLP + postnorm ----------------
def make_out_block_kernel(has_skip):
    def kernel(*refs):
        if has_skip:
            (a_ref, skip_ref, pw_ref, pb_ref, gpre_ref, bpre_ref,
             w1_ref, b1_ref, w2_ref, b2_ref, gpost_ref, bpost_ref, o_ref) = refs
        else:
            (a_ref, pw_ref, pb_ref, gpre_ref, bpre_ref,
             w1_ref, b1_ref, w2_ref, b2_ref, gpost_ref, bpost_ref, o_ref) = refs

        z = jnp.dot(a_ref[...], pw_ref[...],                   # bf16 x bf16 -> f32
                    preferred_element_type=jnp.float32) + pb_ref[...]
        if has_skip:
            z = z + skip_ref[...]
        z = _layernorm_f32(z, gpre_ref[...], bpre_ref[...])
        h = _gelu_exact(
            jnp.dot(z.astype(jnp.bfloat16), w1_ref[...],
                    preferred_element_type=jnp.float32) + b1_ref[...])
        z = z + jnp.dot(h.astype(jnp.bfloat16), w2_ref[...],
                        preferred_element_type=jnp.float32) + b2_ref[...]
        o_ref[...] = _layernorm_f32(z, gpost_ref[...], bpost_ref[...])
    return kernel


def out_block(a, skip_flat, proj, prenorm, mlp, postnorm):
    M, inner = a.shape
    D = proj[0].shape[1]
    Dh = mlp[0].shape[1]
    tm = min(_TM_PREF, _round_up(M, 16))
    has_skip = skip_flat is not None

    inputs = [a]
    in_specs = [pl.BlockSpec((tm, inner), lambda i: (i, 0))]
    if has_skip:
        inputs.append(skip_flat)
        in_specs.append(pl.BlockSpec((tm, D), lambda i: (i, 0)))
    inputs += [proj[0], proj[1], prenorm[0], prenorm[1],
               mlp[0], mlp[1], mlp[2], mlp[3], postnorm[0], postnorm[1]]
    in_specs += [
        pl.BlockSpec((inner, D), lambda i: (0, 0)),
        pl.BlockSpec((1, D), lambda i: (0, 0)),
        pl.BlockSpec((1, D), lambda i: (0, 0)),
        pl.BlockSpec((1, D), lambda i: (0, 0)),
        pl.BlockSpec((D, Dh), lambda i: (0, 0)),
        pl.BlockSpec((1, Dh), lambda i: (0, 0)),
        pl.BlockSpec((Dh, D), lambda i: (0, 0)),
        pl.BlockSpec((1, D), lambda i: (0, 0)),
        pl.BlockSpec((1, D), lambda i: (0, 0)),
        pl.BlockSpec((1, D), lambda i: (0, 0)),
    ]

    return pl.pallas_call(
        make_out_block_kernel(has_skip),
        out_shape=jax.ShapeDtypeStruct((M, D), jnp.float32),
        grid=(pl.cdiv(M, tm),),
        in_specs=in_specs,
        out_specs=pl.BlockSpec((tm, D), lambda i: (i, 0)),
        compiler_params=_cp("parallel"),
    )(*inputs)


# ------------------------------------ full forward -----------------------------------
def cross_attention_forward(params, q, k, v, skip=None):
    b, n, d, H, W = q.shape
    _, _, _, hh, ww = k.shape
    heads, dim_head = params["heads"], params["dim_head"]
    inner = heads * dim_head
    scale = dim_head ** (-0.5)
    Q = H * W
    K = hh * ww

    # bf16 cast BEFORE the layout transpose: halves HBM traffic of the glue transpose
    # and of the ln_linear input reads (LN stats are recomputed in f32 in-kernel).
    # TODO(synk): fuse the 'b n d H W -> (b n H W) d' transpose into ln_linear
    # (block over the original layout + in-VMEM transpose) to drop these HBM passes.
    q_t = jnp.transpose(q.astype(jnp.bfloat16), (0, 1, 3, 4, 2)).reshape(b * n * Q, d)
    k_t = jnp.transpose(k.astype(jnp.bfloat16), (0, 1, 3, 4, 2)).reshape(b * n * K, d)
    v_t = jnp.transpose(v.astype(jnp.bfloat16), (0, 1, 3, 4, 2)).reshape(b * n * K, d)

    gq, bq, wq, wbq = params["to_q"]
    gk, bk, wk, wbk = params["to_k"]
    gv, bv, wv, wbv = params["to_v"]

    # Fold the attention scale into the q projection (weights AND bias).
    wq_s = (wq.astype(jnp.float32) * scale).astype(wq.dtype)
    wbq_s = wbq * scale

    q_p = ln_linear(q_t, gq, bq, wq_s, wbq_s)    # (b*n*Q, inner) bf16, pre-scaled
    k_p = ln_linear(k_t, gk, bk, wk, wbk)        # (b*n*K, inner) bf16
    v_p = ln_linear(v_t, gv, bv, wv, wbv)        # (b*n*K, inner) bf16

    # Flash-style attention: output already in merged 'b Q (m d)' layout.
    a = cross_attention_core(q_p, k_p, v_p, b=b, n=n, q_len=Q, k_len=K,
                             heads=heads, dim_head=dim_head)
    a = a.reshape(b * Q, inner)                  # contiguous reshape

    skip_flat = None
    if skip is not None:
        skip_flat = jnp.transpose(skip, (0, 2, 3, 1)).reshape(b * Q, d)

    z = out_block(a, skip_flat, params["proj"], params["prenorm"],
                  params["mlp"], params["postnorm"])
    return z.reshape(b, H, W, d).transpose(0, 3, 1, 2)   # 'b (H W) d -> b d H W'


# ------------------------------- pure-JAX reference ----------------------------------
def reference_forward(p, q, k, v, skip=None):
    b, n, d, H, W = q.shape
    _, _, _, hh, ww = k.shape
    heads, dim_head = p["heads"], p["dim_head"]
    scale = dim_head ** (-0.5)
    Q, K = H * W, hh * ww
    f32 = lambda t: t.astype(jnp.float32)

    def ln(x, g, bb):
        mu = x.mean(-1, keepdims=True)
        var = ((x - mu) ** 2).mean(-1, keepdims=True)
        return (x - mu) / jnp.sqrt(var + EPS) * g + bb

    qf = jnp.transpose(q, (0, 1, 3, 4, 2)).reshape(b, n, Q, d)
    kf = jnp.transpose(k, (0, 1, 3, 4, 2)).reshape(b, n, K, d)
    vf = jnp.transpose(v, (0, 1, 3, 4, 2)).reshape(b, n * K, d)

    gq, bq, wq, wbq = p["to_q"]
    gk, bk, wk, wbk = p["to_k"]
    gv, bv, wv, wbv = p["to_v"]
    qp = ln(qf, gq, bq) @ f32(wq) + wbq
    kp = ln(kf, gk, bk) @ f32(wk) + wbk
    vp = ln(vf, gv, bv) @ f32(wv) + wbv

    qh = (qp.reshape(b, n, Q, heads, dim_head)
             .transpose(0, 3, 1, 2, 4).reshape(b * heads, n, Q, dim_head))
    kh = (kp.reshape(b, n, K, heads, dim_head)
             .transpose(0, 3, 1, 2, 4).reshape(b * heads, n, K, dim_head))
    vh = (vp.reshape(b, n * K, heads, dim_head)
             .transpose(0, 2, 1, 3).reshape(b * heads, n * K, dim_head))

    dot = scale * jnp.einsum("bnqd,bnkd->bnqk", qh, kh)
    dot = dot.transpose(0, 2, 1, 3).reshape(b * heads, Q, n * K)
    att = jax.nn.softmax(dot, axis=-1)
    a = jnp.einsum("bqk,bkd->bqd", att, vh)
    a = (a.reshape(b, heads, Q, dim_head)
          .transpose(0, 2, 1, 3).reshape(b, Q, heads * dim_head))

    z = a @ f32(p["proj"][0]) + p["proj"][1]
    if skip is not None:
        z = z + jnp.transpose(skip, (0, 2, 3, 1)).reshape(b, Q, d)
    z = ln(z, p["prenorm"][0], p["prenorm"][1])
    h = z @ f32(p["mlp"][0]) + p["mlp"][1]
    h = 0.5 * h * (1.0 + lax.erf(h * 0.7071067811865476))
    z = z + h @ f32(p["mlp"][2]) + p["mlp"][3]
    z = ln(z, p["postnorm"][0], p["postnorm"][1])
    return z.reshape(b, H, W, d).transpose(0, 3, 1, 2)


# ------------------------------------ params -----------------------------------------
def init_params(key, dim, heads, dim_head):
    inner = heads * dim_head
    keys = jax.random.split(key, 16)

    def lin(k_, fan_in, fan_out):
        kw, kb = jax.random.split(k_)
        # matmul weights stored in bf16 (MXU operand dtype); biases stay f32
        w = (jax.random.normal(kw, (fan_in, fan_out), jnp.float32)
             / jnp.sqrt(float(fan_in))).astype(jnp.bfloat16)
        b = 0.01 * jax.random.normal(kb, (1, fan_out), jnp.float32)
        return w, b

    def ln_params(k_, d_):
        kg, kb = jax.random.split(k_)
        g = 1.0 + 0.1 * jax.random.normal(kg, (1, d_), jnp.float32)
        b = 0.1 * jax.random.normal(kb, (1, d_), jnp.float32)
        return g, b

    p = {"heads": heads, "dim_head": dim_head}
    for idx, name in enumerate(("to_q", "to_k", "to_v")):
        g, b = ln_params(keys[idx], dim)
        w, wb = lin(keys[idx + 3], dim, inner)          # qkv_bias=True
        p[name] = (g, b, w, wb)
    p["proj"] = lin(keys[6], inner, dim)
    p["prenorm"] = ln_params(keys[7], dim)
    w1, b1 = lin(keys[8], dim, 2 * dim)
    w2, b2 = lin(keys[9], 2 * dim, dim)
    p["mlp"] = (w1, b1, w2, b2)
    p["postnorm"] = ln_params(keys[10], dim)
    return p


if __name__ == "__main__":
    b, n, dim, heads, dim_head = 2, 2, 32, 2, 16
    H = W = 4
    h = w = 4

    root = jax.random.PRNGKey(0)
    k_params, k_q, k_k, k_v, k_skip = jax.random.split(root, 5)
    params = init_params(k_params, dim, heads, dim_head)

    q = jax.random.normal(k_q, (b, n, dim, H, W), jnp.float32)
    k = jax.random.normal(k_k, (b, n, dim, h, w), jnp.float32)
    v = jax.random.normal(k_v, (b, n, dim, h, w), jnp.float32)
    skip = jax.random.normal(k_skip, (b, dim, H, W), jnp.float32)

    # with skip
    out = jax.block_until_ready(cross_attention_forward(params, q, k, v, skip))
    assert out.shape == (b, dim, H, W)
    ref = reference_forward(params, q, k, v, skip)
    err = float(jnp.max(jnp.abs(out - ref)))
    assert jnp.allclose(out, ref, atol=5e-2, rtol=5e-2), f"max abs err {err}"

    # skip=None path (compile-time gated kernel, no zeros tensor)
    out_ns = jax.block_until_ready(cross_attention_forward(params, q, k, v, None))
    ref_ns = reference_forward(params, q, k, v, None)
    err_ns = float(jnp.max(jnp.abs(out_ns - ref_ns)))
    assert jnp.allclose(out_ns, ref_ns, atol=5e-2, rtol=5e-2), f"max abs err {err_ns}"

    print("KERNEL_OK")
</pallas_src>

<mosaic_0001>
module attributes {stable_mosaic.version = 11 : i64} {
  func.func @ln_linear_kernel(%arg0: i32, %arg1: memref<64x32xbf16, #tpu.memory_space<vmem>>, %arg2: memref<1x32xf32, #tpu.memory_space<vmem>>, %arg3: memref<1x32xf32, #tpu.memory_space<vmem>>, %arg4: memref<32x32xbf16, #tpu.memory_space<vmem>>, %arg5: memref<1x32xf32, #tpu.memory_space<vmem>>, %arg6: memref<64x32xbf16, #tpu.memory_space<vmem>>) attributes {dimension_semantics = [#tpu.dimension_semantics<parallel>], iteration_bounds = array<i64: 1>, scalar_prefetch = 0 : i64, scratch_operands = 0 : i64, tpu.core_type = #tpu.core_type<tc>, window_params = [{transform_indices = @transform_0, window_bounds = array<i64: 64, 32>}, {pipeline_mode = #tpu.pipeline_mode<synchronous>, transform_indices = @transform_1, window_bounds = array<i64: 1, 32>}, {pipeline_mode = #tpu.pipeline_mode<synchronous>, transform_indices = @transform_2, window_bounds = array<i64: 1, 32>}, {pipeline_mode = #tpu.pipeline_mode<synchronous>, transform_indices = @transform_3, window_bounds = array<i64: 32, 32>}, {pipeline_mode = #tpu.pipeline_mode<synchronous>, transform_indices = @transform_4, window_bounds = array<i64: 1, 32>}, {transform_indices = @transform_5, window_bounds = array<i64: 64, 32>}]} {
    %c0 = arith.constant 0 : index
    %c0_0 = arith.constant 0 : index
    %0 = vector.load %arg1[%c0, %c0_0] : memref<64x32xbf16, #tpu.memory_space<vmem>>, vector<64x32xbf16>
    %1 = arith.extf %0 : vector<64x32xbf16> to vector<64x32xf32>
    %c0_1 = arith.constant 0 : index
    %c0_2 = arith.constant 0 : index
    %2 = vector.load %arg2[%c0_1, %c0_2] : memref<1x32xf32, #tpu.memory_space<vmem>>, vector<1x32xf32>
    %c0_3 = arith.constant 0 : index
    %c0_4 = arith.constant 0 : index
    %3 = vector.load %arg3[%c0_3, %c0_4] : memref<1x32xf32, #tpu.memory_space<vmem>>, vector<1x32xf32>
    %cst = arith.constant dense<0.000000e+00> : vector<64xf32>
    %4 = vector.multi_reduction <add>, %1, %cst [1] : vector<64x32xf32> to vector<64xf32>
    %5 = vector.shape_cast %4 : vector<64xf32> to vector<64x1xf32>
    %cst_5 = arith.constant 3.200000e+01 : f32
    %6 = vector.broadcast %cst_5 : f32 to vector<64x1xf32>
    %7 = arith.divf %5, %6 : vector<64x1xf32>
    %8 = vector.broadcast %7 : vector<64x1xf32> to vector<64x32xf32>
    %9 = arith.subf %1, %8 : vector<64x32xf32>
    %10 = arith.mulf %9, %9 : vector<64x32xf32>
    %cst_6 = arith.constant dense<0.000000e+00> : vector<64xf32>
    %11 = vector.multi_reduction <add>, %10, %cst_6 [1] : vector<64x32xf32> to vector<64xf32>
    %12 = vector.shape_cast %11 : vector<64xf32> to vector<64x1xf32>
    %cst_7 = arith.constant 3.200000e+01 : f32
    %13 = vector.broadcast %cst_7 : f32 to vector<64x1xf32>
    %14 = arith.divf %12, %13 : vector<64x1xf32>
    %15 = vector.broadcast %7 : vector<64x1xf32> to vector<64x32xf32>
    %16 = arith.subf %1, %15 : vector<64x32xf32>
    %cst_8 = arith.constant 9.99999974E-6 : f32
    %17 = vector.broadcast %cst_8 : f32 to vector<64x1xf32>
    %18 = arith.addf %14, %17 : vector<64x1xf32>
    %19 = math.rsqrt %18 : vector<64x1xf32>
    %20 = vector.broadcast %19 : vector<64x1xf32> to vector<64x32xf32>
    %21 = arith.mulf %16, %20 : vector<64x32xf32>
    %22 = vector.broadcast %2 : vector<1x32xf32> to vector<64x32xf32>
    %23 = arith.mulf %21, %22 : vector<64x32xf32>
    %24 = vector.broadcast %3 : vector<1x32xf32> to vector<64x32xf32>
    %25 = arith.addf %23, %24 : vector<64x32xf32>
    %26 = arith.truncf %25 : vector<64x32xf32> to vector<64x32xbf16>
    %c0_9 = arith.constant 0 : index
    %c0_10 = arith.constant 0 : index
    %27 = vector.load %arg4[%c0_9, %c0_10] : memref<32x32xbf16, #tpu.memory_space<vmem>>, vector<32x32xbf16>
    %cst_11 = arith.constant dense<0.000000e+00> : vector<64x32xf32>
    %28 = tpu.matmul %26, %27, %cst_11 {dimension_numbers = #tpu.dot_dimension_numbers<[1], [0], [0], [1], [0, 0, 1, 1], [], []>} : vector<64x32xbf16>, vector<32x32xbf16>, vector<64x32xf32> -> vector<64x32xf32>
    %c0_12 = arith.constant 0 : index
    %c0_13 = arith.constant 0 : index
    %29 = vector.load %arg5[%c0_12, %c0_13] : memref<1x32xf32, #tpu.memory_space<vmem>>, vector<1x32xf32>
    %30 = vector.broadcast %29 : vector<1x32xf32> to vector<64x32xf32>
    %31 = arith.addf %28, %30 : vector<64x32xf32>
    %32 = arith.truncf %31 : vector<64x32xf32> to vector<64x32xbf16>
    %c0_14 = arith.constant 0 : index
    %c0_15 = arith.constant 0 : index
    %33 = vector.load %arg6[%c0_14, %c0_15] : memref<64x32xbf16, #tpu.memory_space<vmem>>, vector<64x32xbf16>
    tpu.vector_store %arg6[%c0_14, %c0_15], %32 {strides = array<i32>} : memref<64x32xbf16, #tpu.memory_space<vmem>>, vector<64x32xbf16>,
    return
  }
  func.func @transform_0(%arg0: i32) -> (i32, i32) {
    %c0_i32 = arith.constant 0 : i32
    %c0_i32_0 = arith.constant 0 : i32
    return %arg0, %c0_i32 : i32, i32
  }
  func.func @transform_1(%arg0: i32) -> (i32, i32) {
    %c0_i32 = arith.constant 0 : i32
    %c0_i32_0 = arith.constant 0 : i32
    %c0_i32_1 = arith.constant 0 : i32
    return %c0_i32, %c0_i32_0 : i32, i32
  }
  func.func @transform_2(%arg0: i32) -> (i32, i32) {
    %c0_i32 = arith.constant 0 : i32
    %c0_i32_0 = arith.constant 0 : i32
    %c0_i32_1 = arith.constant 0 : i32
    return %c0_i32, %c0_i32_0 : i32, i32
  }
  func.func @transform_3(%arg0: i32) -> (i32, i32) {
    %c0_i32 = arith.constant 0 : i32
    %c0_i32_0 = arith.constant 0 : i32
    %c0_i32_1 = arith.constant 0 : i32
    return %c0_i32, %c0_i32_0 : i32, i32
  }
  func.func @transform_4(%arg0: i32) -> (i32, i32) {
    %c0_i32 = arith.constant 0 : i32
    %c0_i32_0 = arith.constant 0 : i32
    %c0_i32_1 = arith.constant 0 : i32
    return %c0_i32, %c0_i32_0 : i32, i32
  }
  func.func @transform_5(%arg0: i32) -> (i32, i32) {
    %c0_i32 = arith.constant 0 : i32
    %c0_i32_0 = arith.constant 0 : i32
    return %arg0, %c0_i32 : i32, i32
  }
}

</mosaic_0001>

<llo_original>
// kernel: tpu_custom_call.1
$region0: #{tpu_custom_call.1}
  #allocation0 [shape = 'u32[]', space=smem, size = 0x4, offset = 0x4, fixed_abs, tag = 'smem constant byte address 0x4 - core index']
  #allocation1 [shape = 'u32[144,128]{1,0:T(1,128)}', space=vmem, size = 0x12000, scoped, tag = 'internal scratch']
  %s0 = inlined_call_operand.hbm [shape: bf16[64,32], index: 0, kind: input, shape index: {}]
  %s1 = inlined_call_operand.hbm [shape: f32[1,32], index: 1, kind: input, shape index: {}]
  %s2 = inlined_call_operand.hbm [shape: f32[1,32], index: 2, kind: input, shape index: {}]
  %s3 = inlined_call_operand.hbm [shape: bf16[32,32], index: 3, kind: input, shape index: {}]
  %s4 = inlined_call_operand.hbm [shape: f32[1,32], index: 4, kind: input, shape index: {}]
  %s5 = inlined_call_operand.hbm [shape: bf16[64,32], index: 5, kind: output, shape index: {}]
  %s6 = sld [smem:[#allocation0]]
  $region50: #{tpu_custom_call.1} parent=0
    _
  %s8 = ssub.s32 1, %s6
  %s9 = scalar_select 0, %s8, %s6
  $region1: #{tpu_custom_call.1} parent=0
    #allocation2 [shape = 'u8[16384]{0}', space=vmem, size = 0x4000, scoped, tag = 'input window, operand 0, single buffered']
    #allocation3 [shape = 's32[1]{0}', space=sflag, size = 0x4, scoped, tag = 'scoped memory for tpu_custom_call.1']
    #allocation4 [shape = 's32[1]{0}', space=sflag, size = 0x4, scoped, tag = 'scoped memory for tpu_custom_call.1']
    #allocation5 [shape = 'u8[512]{0}', space=vmem, size = 0x400, scoped, tag = 'input window, operand 1, single buffered']
    #allocation6 [shape = 's32[1]{0}', space=sflag, size = 0x4, scoped, tag = 'scoped memory for tpu_custom_call.1']
    #allocation7 [shape = 'u8[512]{0}', space=vmem, size = 0x400, scoped, tag = 'input window, operand 2, single buffered']
    #allocation8 [shape = 'u8[8192]{0}', space=vmem, size = 0x2000, scoped, tag = 'input window, operand 3, single buffered']
    #allocation9 [shape = 's32[1]{0}', space=sflag, size = 0x4, scoped, tag = 'scoped memory for tpu_custom_call.1']
    #allocation10 [shape = 'u8[512]{0}', space=vmem, size = 0x400, scoped, tag = 'input window, operand 4, single buffered']
    #allocation11 [shape = 'u8[16384]{0}', space=vmem, size = 0x4000, scoped, tag = 'output window, operand 0, single buffered']
    %10 = vsyncpa [#allocation3], 0
    %11 = vsyncpa [#allocation6], 0
    %12 = vsyncpa [#allocation9], 0
    %13 = vsyncpa [#allocation4], 0
    // Predicated region
    $region2: #{tpu_custom_call.1} parent=1 // pred_check
      _
    $region3: #{tpu_custom_call.1} parent=1 // pred_check_branch
      %15 = sbr.rel (0) target = $region5
    $region4: #{tpu_custom_call.1} parent=1 // pred_region
      %s17 = ssub.s32 512, 512
      %18 = vsyncadd [#allocation3], %s17
      %s19 = sshll.u32 [#allocation2], 4
      %s20 = int_to_ptr.vmem [resolvable:$true] %s19
      %25 = dma.hbm_to_vmem [thread:$0]  %s0, 512, %s20, [#allocation3], 64, 64, 4
    $region5: #{tpu_custom_call.1} parent=1 // pred_fallthru
      _
    // Predicated region
    $region6: #{tpu_custom_call.1} parent=1 // pred_check
      _
    $region7: #{tpu_custom_call.1} parent=1 // pred_check_branch
      %27 = sbr.rel (0) target = $region9
    $region8: #{tpu_custom_call.1} parent=1 // pred_region
      %s29 = ssub.s32 16, 16
      %30 = vsyncadd [#allocation6], %s29
      %s32 = sshll.u32 [#allocation5], 4
      %s33 = int_to_ptr.vmem [resolvable:$true] %s32
      %35 = dma.hbm_to_vmem [thread:$0]  %s1, 16, %s33, [#allocation6]
    $region9: #{tpu_custom_call.1} parent=1 // pred_fallthru
      _
    // Predicated region
    $region10: #{tpu_custom_call.1} parent=1 // pred_check
      _
    $region11: #{tpu_custom_call.1} parent=1 // pred_check_branch
      %37 = sbr.rel (0) target = $region13
    $region12: #{tpu_custom_call.1} parent=1 // pred_region
      %s39 = ssub.s32 16, 16
      %40 = vsyncadd [#allocation6], %s39
      %s42 = sshll.u32 [#allocation7], 4
      %s43 = int_to_ptr.vmem [resolvable:$true] %s42
      %45 = dma.hbm_to_vmem [thread:$0]  %s2, 16, %s43, [#allocation6]
    $region13: #{tpu_custom_call.1} parent=1 // pred_fallthru
      _
    // Predicated region
    $region14: #{tpu_custom_call.1} parent=1 // pred_check
      _
    $region15: #{tpu_custom_call.1} parent=1 // pred_check_branch
      %47 = sbr.rel (0) target = $region17
    $region16: #{tpu_custom_call.1} parent=1 // pred_region
      %s49 = ssub.s32 256, 256
      %50 = vsyncadd [#allocation9], %s49
      %s51 = sshll.u32 [#allocation8], 4
      %s52 = int_to_ptr.vmem [resolvable:$true] %s51
      %57 = dma.hbm_to_vmem [thread:$0]  %s3, 256, %s52, [#allocation9], 64, 64, 4
    $region17: #{tpu_custom_call.1} parent=1 // pred_fallthru
      _
    // Predicated region
    $region18: #{tpu_custom_call.1} parent=1 // pred_check
      _
    $region19: #{tpu_custom_call.1} parent=1 // pred_check_branch
      %59 = sbr.rel (0) target = $region21
    $region20: #{tpu_custom_call.1} parent=1 // pred_region
      %s61 = ssub.s32 16, 16
      %62 = vsyncadd [#allocation9], %s61
      %s64 = sshll.u32 [#allocation10], 4
      %s65 = int_to_ptr.vmem [resolvable:$true] %s64
      %67 = dma.hbm_to_vmem [thread:$0]  %s4, 16, %s65, [#allocation9]
    $region21: #{tpu_custom_call.1} parent=1 // pred_fallthru
      _
    // Predicated region
    $region22: #{tpu_custom_call.1} parent=1 // pred_check
      _
    $region23: #{tpu_custom_call.1} parent=1 // pred_check_branch
      %69 = sbr.rel (0) target = $region25
    $region24: #{tpu_custom_call.1} parent=1 // pred_region
      %70 = dma.done [#allocation3], 512
    $region25: #{tpu_custom_call.1} parent=1 // pred_fallthru
      _
    // Predicated region
    $region26: #{tpu_custom_call.1} parent=1 // pred_check
      _
    $region27: #{tpu_custom_call.1} parent=1 // pred_check_branch
      %72 = sbr.rel (0) target = $region29
    $region28: #{tpu_custom_call.1} parent=1 // pred_region
      %73 = dma.done [#allocation6], 16
    $region29: #{tpu_custom_call.1} parent=1 // pred_fallthru
      _
    // Predicated region
    $region30: #{tpu_custom_call.1} parent=1 // pred_check
      _
    $region31: #{tpu_custom_call.1} parent=1 // pred_check_branch
      %75 = sbr.rel (0) target = $region33
    $region32: #{tpu_custom_call.1} parent=1 // pred_region
      %76 = dma.done [#allocation6], 16
    $region33: #{tpu_custom_call.1} parent=1 // pred_fallthru
      _
    // Predicated region
    $region34: #{tpu_custom_call.1} parent=1 // pred_check
      _
    $region35: #{tpu_custom_call.1} parent=1 // pred_check_branch
      %78 = sbr.rel (0) target = $region37
    $region36: #{tpu_custom_call.1} parent=1 // pred_region
      %79 = dma.done [#allocation9], 256
    $region37: #{tpu_custom_call.1} parent=1 // pred_fallthru
      _
    // Predicated region
    $region38: #{tpu_custom_call.1} parent=1 // pred_check
      _
    $region39: #{tpu_custom_call.1} parent=1 // pred_check_branch
      %81 = sbr.rel (0) target = $region41
    $region40: #{tpu_custom_call.1} parent=1 // pred_region
      %82 = dma.done [#allocation9], 16
    $region41: #{tpu_custom_call.1} parent=1 // pred_fallthru
      _
    %v84 = vld [vmem:[#allocation2] sm:$0xf]
    %v85 = vld [vmem:[#allocation2 + $0x4] sm:$0xf]
    %v86 = vld [vmem:[#allocation2 + $0x8] sm:$0xf]
    %v87 = vld [vmem:[#allocation2 + $0xc] sm:$0xf]
    %v88 = vld [vmem:[#allocation2 + $0x10] sm:$0xf]
    %v89 = vld [vmem:[#allocation2 + $0x14] sm:$0xf]
    %v90 = vld [vmem:[#allocation2 + $0x18] sm:$0xf]
    %v91 = vld [vmem:[#allocation2 + $0x1c] sm:$0xf]
    %v92 = vunpack.c.l.bf16 %v84
    %v93 = vunpack.c.l.bf16 %v85
    %v94 = vunpack.c.l.bf16 %v86
    %v95 = vunpack.c.l.bf16 %v87
    %v96 = vunpack.c.l.bf16 %v88
    %v97 = vunpack.c.l.bf16 %v89
    %v98 = vunpack.c.l.bf16 %v90
    %v99 = vunpack.c.l.bf16 %v91
    %v100 = vld [vmem:[#allocation5] sm:$0x1]
    %v101 = vld [vmem:[#allocation7] sm:$0x1]
    %vm102 = vcmask 261120
    %v103 = vsel %vm102, %v92, 0.0
    %104 = vadd.xlane.f32.xlu0 %v103
    %v105 = vpop.xlane.xlu0 %104
    %v106 = vsel %vm102, %v93, 0.0
    %107 = vadd.xlane.f32.xlu0 %v106
    %v108 = vpop.xlane.xlu0 %107
    %v109 = vsel %vm102, %v94, 0.0
    %110 = vadd.xlane.f32.xlu0 %v109
    %v111 = vpop.xlane.xlu0 %110
    %v112 = vsel %vm102, %v95, 0.0
    %113 = vadd.xlane.f32.xlu0 %v112
    %v114 = vpop.xlane.xlu0 %113
    %v115 = vsel %vm102, %v96, 0.0
    %116 = vadd.xlane.f32.xlu0 %v115
    %v117 = vpop.xlane.xlu0 %116
    %v118 = vsel %vm102, %v97, 0.0
    %119 = vadd.xlane.f32.xlu0 %v118
    %v120 = vpop.xlane.xlu0 %119
    %v121 = vsel %vm102, %v98, 0.0
    %122 = vadd.xlane.f32.xlu0 %v121
    %v123 = vpop.xlane.xlu0 %122
    %v124 = vsel %vm102, %v99, 0.0
    %125 = vadd.xlane.f32.xlu0 %v124
    %v126 = vpop.xlane.xlu0 %125
    %v127 = vrcp.pop 32.0
    %v128 = vmul.f32 %v105, %v127
    %v129 = vmul.f32 %v108, %v127
    %v130 = vmul.f32 %v111, %v127
    %v131 = vmul.f32 %v114, %v127
    %v132 = vmul.f32 %v117, %v127
    %v133 = vmul.f32 %v120, %v127
    %v134 = vmul.f32 %v123, %v127
    %v135 = vmul.f32 %v126, %v127
    %v136 = vsub.f32 %v92, %v128
    %v137 = vsub.f32 %v93, %v129
    %v138 = vsub.f32 %v94, %v130
    %v139 = vsub.f32 %v95, %v131
    %v140 = vsub.f32 %v96, %v132
    %v141 = vsub.f32 %v97, %v133
    %v142 = vsub.f32 %v98, %v134
    %v143 = vsub.f32 %v99, %v135
    %v144 = vmul.f32 %v136, %v136
    %v145 = vmul.f32 %v137, %v137
    %v146 = vmul.f32 %v138, %v138
    %v147 = vmul.f32 %v139, %v139
    %v148 = vmul.f32 %v140, %v140
    %v149 = vmul.f32 %v141, %v141
    %v150 = vmul.f32 %v142, %v142
    %v151 = vmul.f32 %v143, %v143
    %v152 = vsel %vm102, %v144, 0.0
    %153 = vadd.xlane.f32.xlu0 %v152
    %v154 = vpop.xlane.xlu0 %153
    %v155 = vsel %vm102, %v145, 0.0
    %156 = vadd.xlane.f32.xlu0 %v155
    %v157 = vpop.xlane.xlu0 %156
    %v158 = vsel %vm102, %v146, 0.0
    %159 = vadd.xlane.f32.xlu0 %v158
    %v160 = vpop.xlane.xlu0 %159
    %v161 = vsel %vm102, %v147, 0.0
    %162 = vadd.xlane.f32.xlu0 %v161
    %v163 = vpop.xlane.xlu0 %162
    %v164 = vsel %vm102, %v148, 0.0
    %165 = vadd.xlane.f32.xlu0 %v164
    %v166 = vpop.xlane.xlu0 %165
    %v167 = vsel %vm102, %v149, 0.0
    %168 = vadd.xlane.f32.xlu0 %v167
    %v169 = vpop.xlane.xlu0 %168
    %v170 = vsel %vm102, %v150, 0.0
    %171 = vadd.xlane.f32.xlu0 %v170
    %v172 = vpop.xlane.xlu0 %171
    %v173 = vsel %vm102, %v151, 0.0
    %174 = vadd.xlane.f32.xlu0 %v173
    %v175 = vpop.xlane.xlu0 %174
    %v176 = vmul.f32 %v154, %v127
    %v177 = vmul.f32 %v157, %v127
    %v178 = vmul.f32 %v160, %v127
    %v179 = vmul.f32 %v163, %v127
    %v180 = vmul.f32 %v166, %v127
    %v181 = vmul.f32 %v169, %v127
    %v182 = vmul.f32 %v172, %v127
    %v183 = vmul.f32 %v175, %v127
    %v184 = vadd.f32 %v176, 1e-05
    %v185 = vadd.f32 %v177, 1e-05
    %v186 = vadd.f32 %v178, 1e-05
    %v187 = vadd.f32 %v179, 1e-05
    %v188 = vadd.f32 %v180, 1e-05
    %v189 = vadd.f32 %v181, 1e-05
    %v190 = vadd.f32 %v182, 1e-05
    %v191 = vadd.f32 %v183, 1e-05
    %v192 = vrsqrt.pop %v184
    %v193 = vrsqrt.pop %v185
    %v194 = vrsqrt.pop %v186
    %v195 = vrsqrt.pop %v187
    %v196 = vrsqrt.pop %v188
    %v197 = vrsqrt.pop %v189
    %v198 = vrsqrt.pop %v190
    %v199 = vrsqrt.pop %v191
    %v200 = vmul.f32 %v136, %v192
    %v201 = vmul.f32 %v137, %v193
    %v202 = vmul.f32 %v138, %v194
    %v203 = vmul.f32 %v139, %v195
    %v204 = vmul.f32 %v140, %v196
    %v205 = vmul.f32 %v141, %v197
    %v206 = vmul.f32 %v142, %v198
    %v207 = vmul.f32 %v143, %v199
    %v209 = vlaneseq
    %v210 = vshrl.u32 %v209, 7
    %v211 = vsub.s32 0, %v210
    %v212 = vrot.slane %v100, %v211
    %v214 = vmul.f32 %v200, %v212
    %v215 = vmul.f32 %v201, %v212
    %v216 = vmul.f32 %v202, %v212
    %v217 = vmul.f32 %v203, %v212
    %v218 = vmul.f32 %v204, %v212
    %v219 = vmul.f32 %v205, %v212
    %v220 = vmul.f32 %v206, %v212
    %v221 = vmul.f32 %v207, %v212
    %v223 = vlaneseq
    %v224 = vshrl.u32 %v223, 7
    %v225 = vsub.s32 0, %v224
    %v226 = vrot.slane %v101, %v225
    %v228 = vadd.f32 %v214, %v226
    %v229 = vadd.f32 %v215, %v226
    %v230 = vadd.f32 %v216, %v226
    %v231 = vadd.f32 %v217, %v226
    %v232 = vadd.f32 %v218, %v226
    %v233 = vadd.f32 %v219, %v226
    %v234 = vadd.f32 %v220, %v226
    %v235 = vadd.f32 %v221, %v226
    %v236 = vpack.c.bf16 %v229, %v228
    %v237 = vpack.c.bf16 %v231, %v230
    %v238 = vpack.c.bf16 %v233, %v232
    %v239 = vpack.c.bf16 %v235, %v234
    %v240 = vld [vmem:[#allocation8] sm:$0xf]
    %v241 = vld [vmem:[#allocation8 + $0x4] sm:$0xf]
    %v242 = vld [vmem:[#allocation8 + $0x8] sm:$0xf]
    %v243 = vld [vmem:[#allocation8 + $0xc] sm:$0xf]
    %v244 = vld [vmem:[#allocation10] sm:$0x1]
    %v246 = vlaneseq
    %v247 = vshrl.u32 %v246, 7
    %v248 = vsub.s32 0, %v247
    %v249 = vrot.slane %v244, %v248
    %v255 = vunpack.c.l.b16 %v240
    %v256 = vunpack.c.l.b16 %v241
    %v257 = vunpack.c.l.b16 %v242
    %v258 = vunpack.c.l.b16 %v243
    %v259 = vpack.c.b16 %v256, %v255
    %v260 = vpack.c.b16 %v258, %v257
    %v264 = vsel %vm102, %v236, 0
    %v267 = vsel %vm102, %v237, 0
    %v270 = vsel %vm102, %v238, 0
    %v273 = vsel %vm102, %v239, 0
    %275 = vmatprep.subr.bf16.mxu0 0
    %276 = vmatpush1.bf16.msra.mxu0 %v259
    %277 = vmatprep.subr.bf16.mxu0 0
    %278 = vmatpush1.bf16.msra.mxu0 %v260
    %279 = vmatprep.subr.bf16.mxu0 0
    %280 = vmatpush1.bf16.msra.mxu0 0
    %281 = vmatprep.subr.bf16.mxu0 0
    %282 = vmatpush1.bf16.msra.mxu0 0
    %283 = vmatprep.subr.bf16.mxu0 0
    %284 = vmatpush1.bf16.msra.mxu0 0
    %285 = vmatprep.subr.bf16.mxu0 0
    %286 = vmatpush1.bf16.msra.mxu0 0
    %287 = vmatprep.subr.bf16.mxu0 0
    %288 = vmatpush1.bf16.msra.mxu0 0
    %289 = vmatprep.subr.bf16.mxu0 0
    %290 = vmatpush1.bf16.msra.mxu0 0
    %291 = vmatprep.subr.bf16.mxu0 0
    %292 = vmatpush1.bf16.msra.mxu0 0
    %293 = vmatprep.subr.bf16.mxu0 0
    %294 = vmatpush1.bf16.msra.mxu0 0
    %295 = vmatprep.subr.bf16.mxu0 0
    %296 = vmatpush1.bf16.msra.mxu0 0
    %297 = vmatprep.subr.bf16.mxu0 0
    %298 = vmatpush1.bf16.msra.mxu0 0
    %299 = vmatprep.subr.bf16.mxu0 0
    %300 = vmatpush1.bf16.msra.mxu0 0
    %301 = vmatprep.subr.bf16.mxu0 0
    %302 = vmatpush1.bf16.msra.mxu0 0
    %303 = vmatprep.subr.bf16.mxu0 0
    %304 = vmatpush1.bf16.msra.mxu0 0
    %305 = vmatprep.subr.bf16.mxu0 0
    %306 = vmatpush1.bf16.msra.mxu0 0
    %307 = vmatprep.mubr.bf16.mxu0 0
    %308 = vmatmul.mubr.bf16.gmra.mrb[0].mxu0 %v264
    %v309 = vpop.f32.mrb[0].mxu0
    %v310 = vadd.f32 %v249, %v309
    %v311 = vpop.f32.mrb[0].mxu0
    %v312 = vpop.f32.mrb[0].mxu0
    %v313 = vadd.f32 %v249, %v312
    %v314 = vpop.f32.mrb[0].mxu0
    %315 = vmatprep.mubr.bf16.mxu0 0
    %316 = vmatmul.mubr.bf16.gmra.mrb[0].mxu0 %v267
    %v317 = vpop.f32.mrb[0].mxu0
    %v318 = vadd.f32 %v249, %v317
    %v319 = vpop.f32.mrb[0].mxu0
    %v320 = vpop.f32.mrb[0].mxu0
    %v321 = vadd.f32 %v249, %v320
    %v322 = vpop.f32.mrb[0].mxu0
    %323 = vmatprep.mubr.bf16.mxu0 0
    %324 = vmatmul.mubr.bf16.gmra.mrb[0].mxu0 %v270
    %v325 = vpop.f32.mrb[0].mxu0
    %v326 = vadd.f32 %v249, %v325
    %v327 = vpop.f32.mrb[0].mxu0
    %v328 = vpop.f32.mrb[0].mxu0
    %v329 = vadd.f32 %v249, %v328
    %v330 = vpop.f32.mrb[0].mxu0
    %331 = vmatprep.mubr.bf16.mxu0 0
    %332 = vmatmul.mubr.bf16.gmra.mrb[0].mxu0 %v273
    %v333 = vpop.f32.mrb[0].mxu0
    %v334 = vadd.f32 %v249, %v333
    %v335 = vpop.f32.mrb[0].mxu0
    %v336 = vpop.f32.mrb[0].mxu0
    %v337 = vadd.f32 %v249, %v336
    %v338 = vpop.f32.mrb[0].mxu0
    %339 = vdwg.mxu0
    %v340 = vpack.c.bf16 %v313, %v310
    %v341 = vpack.c.bf16 %v321, %v318
    %v342 = vpack.c.bf16 %v329, %v326
    %v343 = vpack.c.bf16 %v337, %v334
    %v348 = vunpack.c.l.b16 %v340
    %v349 = vunpack.c.h.b16 %v340
    %v350 = vunpack.c.l.b16 %v341
    %v351 = vunpack.c.h.b16 %v341
    %v352 = vunpack.c.l.b16 %v342
    %v353 = vunpack.c.h.b16 %v342
    %v354 = vunpack.c.l.b16 %v343
    %v355 = vunpack.c.h.b16 %v343
    %v356 = vpack.c.b16 %v348, %v348
    %v357 = vpack.c.b16 %v349, %v349
    %v358 = vpack.c.b16 %v350, %v350
    %v359 = vpack.c.b16 %v351, %v351
    %v360 = vpack.c.b16 %v352, %v352
    %v361 = vpack.c.b16 %v353, %v353
    %v362 = vpack.c.b16 %v354, %v354
    %v363 = vpack.c.b16 %v355, %v355
    %vm372 = vcmask 257024
    %373 = vst.msk [vmem:[#allocation11] sm:$0xf] %vm372, %v356
    %374 = vst.msk [vmem:[#allocation11 + $0x4] sm:$0xf] %vm372, %v357
    %375 = vst.msk [vmem:[#allocation11 + $0x8] sm:$0xf] %vm372, %v358
    %376 = vst.msk [vmem:[#allocation11 + $0xc] sm:$0xf] %vm372, %v359
    %377 = vst.msk [vmem:[#allocation11 + $0x10] sm:$0xf] %vm372, %v360
    %378 = vst.msk [vmem:[#allocation11 + $0x14] sm:$0xf] %vm372, %v361
    %379 = vst.msk [vmem:[#allocation11 + $0x18] sm:$0xf] %vm372, %v362
    %380 = vst.msk [vmem:[#allocation11 + $0x1c] sm:$0xf] %vm372, %v363
    // Predicated region
    $region42: #{tpu_custom_call.1} parent=1 // pred_check
      _
    $region43: #{tpu_custom_call.1} parent=1 // pred_check_branch
      %382 = sbr.rel (0) target = $region45
    $region44: #{tpu_custom_call.1} parent=1 // pred_region
      %s384 = ssub.s32 512, 512
      %385 = vsyncadd [#allocation4], %s384
      %s386 = sshll.u32 [#allocation11], 4
      %s387 = int_to_ptr.vmem [resolvable:$true] %s386
      %392 = dma.vmem_to_hbm [thread:$0]  %s387, 512, %s5, [#allocation4], 64, 64, 4
    $region45: #{tpu_custom_call.1} parent=1 // pred_fallthru
      _
    // Predicated region
    $region46: #{tpu_custom_call.1} parent=1 // pred_check
      _
    $region47: #{tpu_custom_call.1} parent=1 // pred_check_branch
      %394 = sbr.rel (0) target = $region49
    $region48: #{tpu_custom_call.1} parent=1 // pred_region
      %395 = dma.done [#allocation4], 512
    $region49: #{tpu_custom_call.1} parent=1 // pred_fallthru
      _
    %396 = vsyncpa [#allocation3], 1
    %397 = vsyncpa [#allocation6], 1
    %398 = vsyncpa [#allocation9], 1
    %399 = vsyncpa [#allocation4], 1

</llo_original>
